<compile_context>
chip_gen: v5e
topology: v5e:2x2
jax: 0.10.0
libtpu: 0.0.40
codegen_flags: <defaults>
</compile_context>

<pallas_src>
import random
from functools import partial

import numpy as np

import jax
import jax.numpy as jnp
from jax.experimental import pallas as pl
from jax.experimental.pallas import tpu as pltpu

W_POS = 1.0
W_MASK = 1.0
# Anchor-lane tile for the IoU kernel.  With the gt-chunked streaming reduction
# the per-tile working set is only a few (8, At) vreg-sized temporaries, so a
# large tile is safe on v5e/v6e/v7x VMEM budgets while amortizing the ~0.35 us
# per-grid-step overhead.
LANE_TILE_CAP = 8192
_VMEM_LIMIT = 32 * 1024 * 1024  # explicit: raises v5e's 16 MiB scoped default


def _round_up(x, m):
    return -(-x // m) * m


# --------------------------------------------------------------------------- #
# Pallas kernels
# --------------------------------------------------------------------------- #
def _iou_reduce_kernel(gx0_ref, gy0_ref, gx1_ref, gy1_ref, an_ref,
                       maxiou_ref, gtarg_ref, bestidx_ref, bestval_sc):
    # gx*_ref/gy*_ref : (Kp, 1)  gt box coords (zero padded rows)
    # an_ref          : (4, At)  anchor [xmin, ymin, xmax, ymax] for this lane tile
    # maxiou_ref      : (1, At)  max IoU over gt per anchor              (tiled out)
    # gtarg_ref       : (1, At)  argmax over gt per anchor               (tiled out)
    # bestidx_ref     : (Kp, 1)  argmax over ALL anchors per gt          (resident accumulator)
    # bestval_sc      : (Kp, 1)  running best IoU per gt                 (VMEM scratch)
    t = pl.program_id(0)
    kp = gx0_ref.shape[0]
    a_tile = an_ref.shape[1]
    n_chunks = kp // 8

    @pl.when(t == 0)
    def _():
        bestval_sc[...] = jnp.full_like(bestval_sc, -1.0)
        bestidx_ref[...] = jnp.zeros_like(bestidx_ref)

    an = an_ref[...]
    ax0 = an[0:1, :]; ay0 = an[1:2, :]; ax1 = an[2:3, :]; ay1 = an[3:4, :]
    an_area_eps = (ax1 - ax0) * (ay1 - ay0) + 1e-8            # eps folded on (1, At)

    # iotas hoisted out of the gt-chunk loop (reused by every chunk)
    ridx = jax.lax.broadcasted_iota(jnp.int32, (8, a_tile), 0)
    lidx = jax.lax.broadcasted_iota(jnp.int32, (8, a_tile), 1)

    run_max = jnp.full((1, a_tile), -1.0, jnp.float32)
    run_arg = jnp.zeros((1, a_tile), jnp.int32)

    # stream gt boxes in sublane chunks of 8: live temporaries stay a few
    # (8, At) vregs instead of a (Kp, At) table re-read four times.
    for c in range(n_chunks):              # static, small trip count (Kp // 8)
        lo, hi = c * 8, (c + 1) * 8
        gx0 = gx0_ref[lo:hi, :]; gy0 = gy0_ref[lo:hi, :]
        gx1 = gx1_ref[lo:hi, :]; gy1 = gy1_ref[lo:hi, :]
        g_area = (gx1 - gx0) * (gy1 - gy0)                     # (8, 1)

        ox = jnp.maximum(jnp.minimum(gx1, ax1) - jnp.maximum(gx0, ax0), 0.0)
        oy = jnp.maximum(jnp.minimum(gy1, ay1) - jnp.maximum(gy0, ay0), 0.0)
        inter = ox * oy                                        # (8, At)
        union = an_area_eps + g_area - inter
        # approx reciprocal -> EUP slot; keeps the VALU free (IoU math is VALU-bound)
        iou = inter * pl.reciprocal(union, approx=True)

        # per-anchor running max/argmax over gt (sublanes); ties -> lowest gt index
        cmax = jnp.max(iou, axis=0, keepdims=True)             # (1, At)
        carg = jnp.min(jnp.where(iou >= cmax, ridx, 8), axis=0, keepdims=True) + lo
        upd = cmax > run_max          # strict ">" keeps the earlier chunk on ties
        run_arg = jnp.where(upd, carg, run_arg)
        run_max = jnp.where(upd, cmax, run_max)

        # per-gt running argmax over anchors (lanes); ties -> lowest anchor index
        rmax = jnp.max(iou, axis=1, keepdims=True)             # (8, 1)
        rarg = jnp.min(jnp.where(iou >= rmax, lidx, a_tile), axis=1, keepdims=True)
        gidx = rarg + t * a_tile
        prev = bestval_sc[lo:hi, :]
        updr = rmax > prev            # strict ">" keeps the earliest tile on ties
        bestidx_ref[lo:hi, :] = jnp.where(updr, gidx, bestidx_ref[lo:hi, :])
        bestval_sc[lo:hi, :] = jnp.where(updr, rmax, prev)

    maxiou_ref[...] = run_max
    gtarg_ref[...] = run_arg


def _loss_kernel(logits_ref, gmask_ref, ploc_ref, gloc_ref, loss_ref):
    # Single-block kernel (no grid): whole working set is ~11*A*4B.
    # logits_ref : (2, A)  class logits (bg / fg); cast to f32 on load (bf16 ok)
    # gmask_ref  : (1, A)  labels: -1 ignore, 0 negative, 1 positive
    # ploc_ref   : (4, A)  predicted (tx, ty, tw, th); cast to f32 on load
    # gloc_ref   : (4, A)  target    (tx, ty, tw, th), zeros where not positive
    # loss_ref   : (1, 1)  SMEM scalar output
    gt = gmask_ref[...]
    logits = logits_ref[...].astype(jnp.float32)
    z = logits[1:2, :] - logits[0:1, :]

    # 2-class cross entropy with ignore_index=-1 in closed form:
    #   ce = softplus(-(2*gt - 1) * (l1 - l0)),  numerically stabilized.
    u = -(2.0 * gt - 1.0) * z
    ce = jnp.maximum(u, 0.0) + jnp.log(1.0 + jnp.exp(-jnp.abs(u)))
    valid = gt >= 0.0
    ce = jnp.where(valid, ce, 0.0)

    # smooth L1 (beta = 1.0) on positive anchors
    d = ploc_ref[...].astype(jnp.float32) - gloc_ref[...]
    ad = jnp.abs(d)
    sl1 = jnp.where(ad < 1.0, 0.5 * d * d, ad - 0.5)
    pos = gt == 1.0
    sl1 = jnp.where(pos, sl1, 0.0)

    # reference: CE mean over valid; sum over 4 coords of per-coord means over
    # positives == (total smooth-L1 sum) / n_pos
    msk_loss = jnp.sum(ce) / jnp.maximum(jnp.sum(valid.astype(jnp.float32)), 1.0)
    loc_loss = jnp.sum(sl1) / jnp.maximum(jnp.sum(pos.astype(jnp.float32)), 1.0)
    loss_ref[0, 0] = W_POS * loc_loss + W_MASK * msk_loss


# --------------------------------------------------------------------------- #
# Jitted wrappers
# --------------------------------------------------------------------------- #
@partial(jax.jit, static_argnames=("a_tile", "a_valid"))
def _iou_reduce(gt_pad, an_pad, *, a_tile, a_valid):
    kp = gt_pad.shape[0]
    ap = an_pad.shape[1]
    # pre-split gt coords so the kernel never lane-slices a lane-sparse (Kp, 4) ref
    gx0 = gt_pad[:, 0:1]
    gy0 = gt_pad[:, 1:2]
    gx1 = gt_pad[:, 2:3]
    gy1 = gt_pad[:, 3:4]
    gt_spec = pl.BlockSpec((kp, 1), lambda t: (0, 0))
    maxiou, gt_arg, best = pl.pallas_call(
        _iou_reduce_kernel,
        out_shape=(jax.ShapeDtypeStruct((1, ap), jnp.float32),
                   jax.ShapeDtypeStruct((1, ap), jnp.int32),
                   jax.ShapeDtypeStruct((kp, 1), jnp.int32)),
        grid_spec=pltpu.PrefetchScalarGridSpec(
            num_scalar_prefetch=0,
            grid=(ap // a_tile,),
            in_specs=[gt_spec, gt_spec, gt_spec, gt_spec,
                      pl.BlockSpec((4, a_tile), lambda t: (0, t))],
            out_specs=(pl.BlockSpec((1, a_tile), lambda t: (0, t)),
                       pl.BlockSpec((1, a_tile), lambda t: (0, t)),
                       pl.BlockSpec((kp, 1), lambda t: (0, 0))),
            scratch_shapes=[pltpu.VMEM((kp, 1), jnp.float32)]),
        compiler_params=pltpu.CompilerParams(
            # anchor axis carries running-argmax accumulators -> reduction axis
            dimension_semantics=("arbitrary",),
            vmem_limit_bytes=_VMEM_LIMIT),
    )(gx0, gy0, gx1, gy1, an_pad)
    # slice to the real anchor count on device -> smaller D2H transfer
    return maxiou[0, :a_valid], gt_arg[0, :a_valid], best[:, 0]


@jax.jit
def _rpn_loss(pred_mask, pred_loc, pos_idx, neg_idx, pos_tloc):
    # pred_mask : (1, 2, 9, F, F)   pred_loc : (1, 4, 9, F, F)
    # pos_idx   : (128,) int32, padded with the OOB sentinel A (dropped on scatter)
    # neg_idx   : (256,) int32, padded with the OOB sentinel A
    # pos_tloc  : (4, 128) f32 regression targets for the sampled positives
    n_anchor = pred_mask.shape[-3] * pred_mask.shape[-2] * pred_mask.shape[-1]
    logits = pred_mask.reshape(2, n_anchor)       # contiguous view, no pad / cast pass
    ploc = pred_loc.reshape(4, n_anchor)

    # build the label / regression-target grids on device from the sampled indices
    gmask = jnp.full((n_anchor,), -1.0, jnp.float32)
    gmask = gmask.at[pos_idx].set(1.0, mode="drop")
    gmask = gmask.at[neg_idx].set(0.0, mode="drop")
    gmask = gmask.reshape(1, n_anchor)
    gloc = jnp.zeros((4, n_anchor), jnp.float32)
    gloc = gloc.at[:, pos_idx].set(pos_tloc, mode="drop")

    loss = pl.pallas_call(
        _loss_kernel,
        out_shape=jax.ShapeDtypeStruct((1, 1), jnp.float32),
        in_specs=[pl.BlockSpec(memory_space=pltpu.MemorySpace.VMEM)] * 4,
        out_specs=pl.BlockSpec(memory_space=pltpu.MemorySpace.SMEM),
        compiler_params=pltpu.CompilerParams(vmem_limit_bytes=_VMEM_LIMIT),
    )(logits, gmask, ploc, gloc)
    return loss[0, 0]


# --------------------------------------------------------------------------- #
# Module
# --------------------------------------------------------------------------- #
class RPNLossPallas:
    def __init__(self, img_size=64, stride=16):
        feat = img_size // stride
        self.feat = feat
        self.stride = stride
        self.img_size = img_size
        self.pos_th = 0.7
        self.neg_th = 0.3

        anw, anh = np.meshgrid([1.0, 0.5, 0.25], [1.0, 0.5, 0.25])
        anw = anw.ravel() * img_size          # (9,)
        anh = anh.ravel() * img_size          # (9,)
        an_xct, an_yct = np.meshgrid(range(feat), range(feat))
        an_xct = an_xct.astype(np.float32) * stride   # (F, F), varies along x (cols)
        an_yct = an_yct.astype(np.float32) * stride   # (F, F), varies along y (rows)

        A = 9 * feat * feat
        self.A = A
        ap128 = _round_up(A, 128)
        n_tiles = -(-ap128 // LANE_TILE_CAP)
        self.a_tile = _round_up(-(-ap128 // n_tiles), 128)     # minimal-pad lane tile
        self.Ap = self.a_tile * n_tiles

        # flattened per-anchor quantities, C-order over (9, F, F)
        self.anw_f = np.repeat(anw, feat * feat).astype(np.float32)
        self.anh_f = np.repeat(anh, feat * feat).astype(np.float32)
        self.an_xct_f = np.tile(an_xct.ravel(), 9).astype(np.float32)
        self.an_yct_f = np.tile(an_yct.ravel(), 9).astype(np.float32)

        an_xmin = self.an_xct_f - self.anw_f / 2
        an_ymin = self.an_yct_f - self.anh_f / 2
        an_xmax = self.an_xct_f + self.anw_f / 2
        an_ymax = self.an_yct_f + self.anh_f / 2
        an_stack = np.stack([an_xmin, an_ymin, an_xmax, an_ymax], 0)  # (4, A)
        an_pad = np.zeros((4, self.Ap), np.float32)
        an_pad[:, :A] = an_stack
        self.an_pad = jnp.asarray(an_pad)      # device-resident anchor table (one-time H2D)

    # ---------------- fused IoU + reductions (Pallas) ---------------- #
    def iou_reductions(self, gt_box):
        K = gt_box.shape[0]
        kp = max(8, _round_up(K, 8))
        gt_pad = np.zeros((kp, 4), np.float32)
        gt_pad[:K] = gt_box
        maxiou, gt_arg, best = _iou_reduce(jnp.asarray(gt_pad), self.an_pad,
                                           a_tile=self.a_tile, a_valid=self.A)
        maxiou = np.asarray(maxiou)
        gt_arg = np.asarray(gt_arg).astype(np.int64)
        best = np.asarray(best)[:K].astype(np.int64)
        return maxiou, gt_arg, best

    # ---------------- target sampling (host numpy glue) ---------------- #
    def bbox2target(self, gt_box):
        # TODO(synk): data-dependent random sampling (np.unique / random.sample /
        # np.random.choice) has no clean Pallas equivalent; stays on host.  Only
        # the fixed-size sampled-index vectors are sent back to the device.
        maxiou, gt_ans, best_per_gt = self.iou_reductions(gt_box)

        idx_best_ans = np.unique(best_per_gt)
        maxiou = maxiou.copy()
        maxiou[idx_best_ans] = -1
        gt_best_ans = gt_ans[idx_best_ans]

        if len(idx_best_ans) < 128:
            idx_pos_ans = np.where(maxiou > self.pos_th)[0]
            gt_pos_ans = gt_ans[idx_pos_ans]
            if len(idx_pos_ans) > 128 - len(idx_best_ans):
                _rand_idx = random.sample(range(len(idx_pos_ans)),
                                          128 - len(idx_best_ans))
                idx_pos_ans = idx_pos_ans[_rand_idx]
                gt_pos_ans = gt_pos_ans[_rand_idx]
            idx_pos_ans = np.concatenate((idx_best_ans, idx_pos_ans), 0)
            gt_pos_ans = np.concatenate((gt_best_ans, gt_pos_ans), 0)
        else:
            _rand_idx = random.sample(range(len(idx_best_ans)), 128)
            idx_pos_ans = idx_best_ans[_rand_idx]
            gt_pos_ans = gt_best_ans[_rand_idx]

        idx_neg_ans = np.where((maxiou > 0) & (maxiou <= self.neg_th))[0]
        if len(idx_neg_ans) == 0:        # guard: the original would crash here
            idx_neg_ans = np.where(maxiou <= self.neg_th)[0]
        idx_neg_ans = np.random.choice(idx_neg_ans, 256 - len(idx_pos_ans))

        n_pos = len(idx_pos_ans)
        n_neg = len(idx_neg_ans)

        # regression targets for the sampled positive anchors (<=128 elements; host)
        # TODO(synk): the original PyTorch code pairs grid-sorted gathered predictions
        # with targets in sampling order; here each positive anchor is paired with its
        # matched gt box (the intended semantics).
        gxc = (gt_box[gt_pos_ans, 0] + gt_box[gt_pos_ans, 2]) / 2
        gyc = (gt_box[gt_pos_ans, 1] + gt_box[gt_pos_ans, 3]) / 2
        gw = gt_box[gt_pos_ans, 2] - gt_box[gt_pos_ans, 0]
        gh = gt_box[gt_pos_ans, 3] - gt_box[gt_pos_ans, 1]
        axc = self.an_xct_f[idx_pos_ans]
        ayc = self.an_yct_f[idx_pos_ans]
        aw = self.anw_f[idx_pos_ans]
        ah = self.anh_f[idx_pos_ans]

        pos_tloc = np.zeros((4, 128), np.float32)
        pos_tloc[0, :n_pos] = (gxc - axc) / aw
        pos_tloc[1, :n_pos] = (gyc - ayc) / ah
        pos_tloc[2, :n_pos] = np.log(gw / aw)
        pos_tloc[3, :n_pos] = np.log(gh / ah)

        pos_idx = np.full((128,), self.A, np.int32)     # sentinel = A -> dropped on device
        pos_idx[:n_pos] = idx_pos_ans
        neg_idx = np.full((256,), self.A, np.int32)
        neg_idx[:n_neg] = idx_neg_ans
        return pos_idx, neg_idx, pos_tloc

    # ---------------- forward ---------------- #
    def __call__(self, pred, gt_box):
        pred_mask, pred_loc = pred               # (1,2,9,F,F), (1,4,9,F,F) device arrays
        gt = np.asarray(gt_box)[0]               # squeeze(0) -> (K, 4), host numpy
        pos_idx, neg_idx, pos_tloc = self.bbox2target(gt)
        return _rpn_loss(pred_mask, pred_loc,
                         jnp.asarray(pos_idx), jnp.asarray(neg_idx),
                         jnp.asarray(pos_tloc))


# --------------------------------------------------------------------------- #
# Demo
# --------------------------------------------------------------------------- #
if __name__ == "__main__":
    random.seed(0)
    np.random.seed(0)
    key = jax.random.PRNGKey(0)

    IMG_SIZE, STRIDE = 64, 16                 # feat = 4, anchors A = 9*4*4 = 144
    model = RPNLossPallas(img_size=IMG_SIZE, stride=STRIDE)
    F_ = model.feat

    k1, k2 = jax.random.split(key)
    pred_mask = jax.random.normal(k1, (1, 2, 9, F_, F_), jnp.float32)
    pred_loc = jax.random.normal(k2, (1, 4, 9, F_, F_), jnp.float32)
    gt_box = jnp.array([[[4.0, 6.0, 44.0, 50.0],
                         [20.0, 10.0, 36.0, 26.0],
                         [2.0, 30.0, 62.0, 62.0]]], jnp.float32)   # (1, K=3, 4)

    # sanity check: fused IoU-reduction kernel vs exact numpy reference
    gt_np = np.asarray(gt_box)[0]
    an_xmin = model.an_xct_f - model.anw_f / 2
    an_ymin = model.an_yct_f - model.anh_f / 2
    an_xmax = model.an_xct_f + model.anw_f / 2
    an_ymax = model.an_yct_f + model.anh_f / 2
    ox = np.maximum(np.minimum(gt_np[:, 2:3], an_xmax[None, :])
                    - np.maximum(gt_np[:, 0:1], an_xmin[None, :]), 0.0)
    oy = np.maximum(np.minimum(gt_np[:, 3:4], an_ymax[None, :])
                    - np.maximum(gt_np[:, 1:2], an_ymin[None, :]), 0.0)
    inter = ox * oy
    union = ((an_xmax - an_xmin) * (an_ymax - an_ymin))[None, :] \
        + ((gt_np[:, 2] - gt_np[:, 0]) * (gt_np[:, 3] - gt_np[:, 1]))[:, None] - inter
    iou_ref = inter / (union + 1e-8)
    maxiou_k, _, _ = model.iou_reductions(gt_np)
    np.testing.assert_allclose(maxiou_k, iou_ref.max(0), rtol=1e-2, atol=1e-2)

    loss = model((pred_mask, pred_loc), gt_box)
    loss = jax.block_until_ready(loss)
    assert np.isfinite(float(loss))
    print("KERNEL_OK")
</pallas_src>

<mosaic_0001>
module attributes {stable_mosaic.version = 11 : i64} {
  func.func @_iou_reduce_kernel(%arg0: i32, %arg1: memref<8x1xf32, #tpu.memory_space<vmem>>, %arg2: memref<8x1xf32, #tpu.memory_space<vmem>>, %arg3: memref<8x1xf32, #tpu.memory_space<vmem>>, %arg4: memref<8x1xf32, #tpu.memory_space<vmem>>, %arg5: memref<4x256xf32, #tpu.memory_space<vmem>>, %arg6: memref<1x256xf32, #tpu.memory_space<vmem>>, %arg7: memref<1x256xi32, #tpu.memory_space<vmem>>, %arg8: memref<8x1xi32, #tpu.memory_space<vmem>>, %arg9: memref<8x1xf32, #tpu.memory_space<vmem>>) attributes {dimension_semantics = [#tpu.dimension_semantics<arbitrary>], iteration_bounds = array<i64: 1>, scalar_prefetch = 0 : i64, scratch_operands = 1 : i64, tpu.core_type = #tpu.core_type<tc>, window_params = [{pipeline_mode = #tpu.pipeline_mode<synchronous>, transform_indices = @transform_0, window_bounds = array<i64: 8, 1>}, {pipeline_mode = #tpu.pipeline_mode<synchronous>, transform_indices = @transform_1, window_bounds = array<i64: 8, 1>}, {pipeline_mode = #tpu.pipeline_mode<synchronous>, transform_indices = @transform_2, window_bounds = array<i64: 8, 1>}, {pipeline_mode = #tpu.pipeline_mode<synchronous>, transform_indices = @transform_3, window_bounds = array<i64: 8, 1>}, {transform_indices = @transform_4, window_bounds = array<i64: 4, 256>}, {transform_indices = @transform_5, window_bounds = array<i64: 1, 256>}, {transform_indices = @transform_6, window_bounds = array<i64: 1, 256>}, {pipeline_mode = #tpu.pipeline_mode<synchronous>, transform_indices = @transform_7, window_bounds = array<i64: 8, 1>}]} {
    %c0_i32 = arith.constant 0 : i32
    %0 = arith.cmpi eq, %arg0, %c0_i32 : i32
    %1 = arith.extui %0 : i1 to i32
    %c0_i32_0 = arith.constant 0 : i32
    %2 = arith.cmpi ne, %1, %c0_i32_0 : i32
    scf.if %2 {
      %cst_32 = arith.constant -1.000000e+00 : f32
      %82 = vector.broadcast %cst_32 : f32 to vector<8x1xf32>
      %c0_33 = arith.constant 0 : index
      %c0_34 = arith.constant 0 : index
      %83 = vector.load %arg9[%c0_33, %c0_34] : memref<8x1xf32, #tpu.memory_space<vmem>>, vector<8x1xf32>
      tpu.vector_store %arg9[%c0_33, %c0_34], %82 {strides = array<i32>} : memref<8x1xf32, #tpu.memory_space<vmem>>, vector<8x1xf32>,
      %c0_i32_35 = arith.constant 0 : i32
      %84 = vector.broadcast %c0_i32_35 : i32 to vector<8x1xi32>
      %c0_36 = arith.constant 0 : index
      %c0_37 = arith.constant 0 : index
      %85 = vector.load %arg8[%c0_36, %c0_37] : memref<8x1xi32, #tpu.memory_space<vmem>>, vector<8x1xi32>
      tpu.vector_store %arg8[%c0_36, %c0_37], %84 {strides = array<i32>} : memref<8x1xi32, #tpu.memory_space<vmem>>, vector<8x1xi32>,
    } else {
    }
    %c0 = arith.constant 0 : index
    %c0_1 = arith.constant 0 : index
    %3 = vector.load %arg5[%c0, %c0_1] : memref<4x256xf32, #tpu.memory_space<vmem>>, vector<4x256xf32>
    %4 = vector.extract_strided_slice %3 {offsets = [0, 0], sizes = [1, 256], strides = [1, 1]} : vector<4x256xf32> to vector<1x256xf32>
    %5 = vector.extract_strided_slice %3 {offsets = [1, 0], sizes = [1, 256], strides = [1, 1]} : vector<4x256xf32> to vector<1x256xf32>
    %6 = vector.extract_strided_slice %3 {offsets = [2, 0], sizes = [1, 256], strides = [1, 1]} : vector<4x256xf32> to vector<1x256xf32>
    %7 = vector.extract_strided_slice %3 {offsets = [3, 0], sizes = [1, 256], strides = [1, 1]} : vector<4x256xf32> to vector<1x256xf32>
    %8 = arith.subf %6, %4 : vector<1x256xf32>
    %9 = arith.subf %7, %5 : vector<1x256xf32>
    %10 = arith.mulf %8, %9 : vector<1x256xf32>
    %cst = arith.constant 9.99999993E-9 : f32
    %11 = vector.broadcast %cst : f32 to vector<1x256xf32>
    %12 = arith.addf %10, %11 : vector<1x256xf32>
    %13 = tpu.iota {dimensions = array<i32: 0>} : vector<8x256xi32>
    %14 = tpu.iota {dimensions = array<i32: 1>} : vector<8x256xi32>
    %cst_2 = arith.constant -1.000000e+00 : f32
    %15 = vector.broadcast %cst_2 : f32 to vector<1x256xf32>
    %c0_i32_3 = arith.constant 0 : i32
    %16 = vector.broadcast %c0_i32_3 : i32 to vector<1x256xi32>
    %c0_4 = arith.constant 0 : index
    %c0_5 = arith.constant 0 : index
    %17 = vector.load %arg1[%c0_4, %c0_5] : memref<8x1xf32, #tpu.memory_space<vmem>>, vector<8x1xf32>
    %c0_6 = arith.constant 0 : index
    %c0_7 = arith.constant 0 : index
    %18 = vector.load %arg2[%c0_6, %c0_7] : memref<8x1xf32, #tpu.memory_space<vmem>>, vector<8x1xf32>
    %c0_8 = arith.constant 0 : index
    %c0_9 = arith.constant 0 : index
    %19 = vector.load %arg3[%c0_8, %c0_9] : memref<8x1xf32, #tpu.memory_space<vmem>>, vector<8x1xf32>
    %c0_10 = arith.constant 0 : index
    %c0_11 = arith.constant 0 : index
    %20 = vector.load %arg4[%c0_10, %c0_11] : memref<8x1xf32, #tpu.memory_space<vmem>>, vector<8x1xf32>
    %21 = arith.subf %19, %17 : vector<8x1xf32>
    %22 = arith.subf %20, %18 : vector<8x1xf32>
    %23 = arith.mulf %21, %22 : vector<8x1xf32>
    %24 = vector.broadcast %19 : vector<8x1xf32> to vector<8x256xf32>
    %25 = vector.broadcast %6 : vector<1x256xf32> to vector<8x256xf32>
    %26 = arith.minimumf %24, %25 : vector<8x256xf32>
    %27 = vector.broadcast %17 : vector<8x1xf32> to vector<8x256xf32>
    %28 = vector.broadcast %4 : vector<1x256xf32> to vector<8x256xf32>
    %29 = arith.maximumf %27, %28 : vector<8x256xf32>
    %30 = arith.subf %26, %29 : vector<8x256xf32>
    %cst_12 = arith.constant 0.000000e+00 : f32
    %31 = vector.broadcast %cst_12 : f32 to vector<8x256xf32>
    %32 = arith.maximumf %30, %31 : vector<8x256xf32>
    %33 = vector.broadcast %20 : vector<8x1xf32> to vector<8x256xf32>
    %34 = vector.broadcast %7 : vector<1x256xf32> to vector<8x256xf32>
    %35 = arith.minimumf %33, %34 : vector<8x256xf32>
    %36 = vector.broadcast %18 : vector<8x1xf32> to vector<8x256xf32>
    %37 = vector.broadcast %5 : vector<1x256xf32> to vector<8x256xf32>
    %38 = arith.maximumf %36, %37 : vector<8x256xf32>
    %39 = arith.subf %35, %38 : vector<8x256xf32>
    %cst_13 = arith.constant 0.000000e+00 : f32
    %40 = vector.broadcast %cst_13 : f32 to vector<8x256xf32>
    %41 = arith.maximumf %39, %40 : vector<8x256xf32>
    %42 = arith.mulf %32, %41 : vector<8x256xf32>
    %43 = vector.broadcast %12 : vector<1x256xf32> to vector<8x256xf32>
    %44 = vector.broadcast %23 : vector<8x1xf32> to vector<8x256xf32>
    %45 = arith.addf %43, %44 : vector<8x256xf32>
    %46 = arith.subf %45, %42 : vector<8x256xf32>
    %47 = tpu.reciprocal %46 {approx = true} : vector<8x256xf32> -> vector<8x256xf32>
    %48 = arith.mulf %42, %47 : vector<8x256xf32>
    %cst_14 = arith.constant dense<0xFF800000> : vector<256xf32>
    %49 = vector.multi_reduction <maximumf>, %48, %cst_14 [0] : vector<8x256xf32> to vector<256xf32>
    %50 = vector.shape_cast %49 : vector<256xf32> to vector<1x256xf32>
    %51 = vector.broadcast %50 : vector<1x256xf32> to vector<8x256xf32>
    %52 = arith.cmpf oge, %48, %51 : vector<8x256xf32>
    %c8_i32 = arith.constant 8 : i32
    %53 = vector.broadcast %c8_i32 : i32 to vector<8x256xi32>
    %54 = arith.select %52, %13, %53 : vector<8x256xi1>, vector<8x256xi32>
    %cst_15 = arith.constant dense<2147483647> : vector<256xi32>
    %55 = vector.multi_reduction <minsi>, %54, %cst_15 [0] : vector<8x256xi32> to vector<256xi32>
    %56 = vector.shape_cast %55 : vector<256xi32> to vector<1x256xi32>
    %c0_i32_16 = arith.constant 0 : i32
    %57 = vector.broadcast %c0_i32_16 : i32 to vector<1x256xi32>
    %58 = arith.addi %56, %57 : vector<1x256xi32>
    %59 = arith.cmpf ogt, %50, %15 : vector<1x256xf32>
    %60 = arith.select %59, %58, %16 : vector<1x256xi1>, vector<1x256xi32>
    %61 = arith.select %59, %50, %15 : vector<1x256xi1>, vector<1x256xf32>
    %cst_17 = arith.constant dense<0xFF800000> : vector<8xf32>
    %62 = vector.multi_reduction <maximumf>, %48, %cst_17 [1] : vector<8x256xf32> to vector<8xf32>
    %63 = vector.shape_cast %62 : vector<8xf32> to vector<8x1xf32>
    %64 = vector.broadcast %63 : vector<8x1xf32> to vector<8x256xf32>
    %65 = arith.cmpf oge, %48, %64 : vector<8x256xf32>
    %c256_i32 = arith.constant 256 : i32
    %66 = vector.broadcast %c256_i32 : i32 to vector<8x256xi32>
    %67 = arith.select %65, %14, %66 : vector<8x256xi1>, vector<8x256xi32>
    %cst_18 = arith.constant dense<2147483647> : vector<8xi32>
    %68 = vector.multi_reduction <minsi>, %67, %cst_18 [1] : vector<8x256xi32> to vector<8xi32>
    %69 = vector.shape_cast %68 : vector<8xi32> to vector<8x1xi32>
    %c256_i32_19 = arith.constant 256 : i32
    %70 = arith.muli %arg0, %c256_i32_19 : i32
    %71 = vector.broadcast %70 : i32 to vector<8x1xi32>
    %72 = arith.addi %69, %71 : vector<8x1xi32>
    %c0_20 = arith.constant 0 : index
    %c0_21 = arith.constant 0 : index
    %73 = vector.load %arg9[%c0_20, %c0_21] : memref<8x1xf32, #tpu.memory_space<vmem>>, vector<8x1xf32>
    %74 = arith.cmpf ogt, %63, %73 : vector<8x1xf32>
    %c0_22 = arith.constant 0 : index
    %c0_23 = arith.constant 0 : index
    %75 = vector.load %arg8[%c0_22, %c0_23] : memref<8x1xi32, #tpu.memory_space<vmem>>, vector<8x1xi32>
    %76 = arith.select %74, %72, %75 : vector<8x1xi1>, vector<8x1xi32>
    %c0_24 = arith.constant 0 : index
    %c0_25 = arith.constant 0 : index
    %77 = vector.load %arg8[%c0_24, %c0_25] : memref<8x1xi32, #tpu.memory_space<vmem>>, vector<8x1xi32>
    tpu.vector_store %arg8[%c0_24, %c0_25], %76 {strides = array<i32>} : memref<8x1xi32, #tpu.memory_space<vmem>>, vector<8x1xi32>,
    %78 = arith.select %74, %63, %73 : vector<8x1xi1>, vector<8x1xf32>
    %c0_26 = arith.constant 0 : index
    %c0_27 = arith.constant 0 : index
    %79 = vector.load %arg9[%c0_26, %c0_27] : memref<8x1xf32, #tpu.memory_space<vmem>>, vector<8x1xf32>
    tpu.vector_store %arg9[%c0_26, %c0_27], %78 {strides = array<i32>} : memref<8x1xf32, #tpu.memory_space<vmem>>, vector<8x1xf32>,
    %c0_28 = arith.constant 0 : index
    %c0_29 = arith.constant 0 : index
    %80 = vector.load %arg6[%c0_28, %c0_29] : memref<1x256xf32, #tpu.memory_space<vmem>>, vector<1x256xf32>
    tpu.vector_store %arg6[%c0_28, %c0_29], %61 {strides = array<i32>} : memref<1x256xf32, #tpu.memory_space<vmem>>, vector<1x256xf32>,
    %c0_30 = arith.constant 0 : index
    %c0_31 = arith.constant 0 : index
    %81 = vector.load %arg7[%c0_30, %c0_31] : memref<1x256xi32, #tpu.memory_space<vmem>>, vector<1x256xi32>
    tpu.vector_store %arg7[%c0_30, %c0_31], %60 {strides = array<i32>} : memref<1x256xi32, #tpu.memory_space<vmem>>, vector<1x256xi32>,
    return
  }
  func.func @transform_0(%arg0: i32) -> (i32, i32) {
    %c0_i32 = arith.constant 0 : i32
    %c0_i32_0 = arith.constant 0 : i32
    %c0_i32_1 = arith.constant 0 : i32
    return %c0_i32, %c0_i32_0 : i32, i32
  }
  func.func @transform_1(%arg0: i32) -> (i32, i32) {
    %c0_i32 = arith.constant 0 : i32
    %c0_i32_0 = arith.constant 0 : i32
    %c0_i32_1 = arith.constant 0 : i32
    return %c0_i32, %c0_i32_0 : i32, i32
  }
  func.func @transform_2(%arg0: i32) -> (i32, i32) {
    %c0_i32 = arith.constant 0 : i32
    %c0_i32_0 = arith.constant 0 : i32
    %c0_i32_1 = arith.constant 0 : i32
    return %c0_i32, %c0_i32_0 : i32, i32
  }
  func.func @transform_3(%arg0: i32) -> (i32, i32) {
    %c0_i32 = arith.constant 0 : i32
    %c0_i32_0 = arith.constant 0 : i32
    %c0_i32_1 = arith.constant 0 : i32
    return %c0_i32, %c0_i32_0 : i32, i32
  }
  func.func @transform_4(%arg0: i32) -> (i32, i32) {
    %c0_i32 = arith.constant 0 : i32
    %c0_i32_0 = arith.constant 0 : i32
    return %c0_i32, %arg0 : i32, i32
  }
  func.func @transform_5(%arg0: i32) -> (i32, i32) {
    %c0_i32 = arith.constant 0 : i32
    %c0_i32_0 = arith.constant 0 : i32
    return %c0_i32, %arg0 : i32, i32
  }
  func.func @transform_6(%arg0: i32) -> (i32, i32) {
    %c0_i32 = arith.constant 0 : i32
    %c0_i32_0 = arith.constant 0 : i32
    return %c0_i32, %arg0 : i32, i32
  }
  func.func @transform_7(%arg0: i32) -> (i32, i32) {
    %c0_i32 = arith.constant 0 : i32
    %c0_i32_0 = arith.constant 0 : i32
    %c0_i32_1 = arith.constant 0 : i32
    return %c0_i32, %c0_i32_0 : i32, i32
  }
}

</mosaic_0001>

<llo_original>
// kernel: _iou_reduce.1
$region0: #{_iou_reduce.1}
  #allocation0 [shape = 'u32[]', space=smem, size = 0x4, offset = 0x4, fixed_abs, tag = 'smem constant byte address 0x4 - core index']
  #allocation1 [shape = 'u32[72,128]{1,0:T(1,128)}', space=vmem, size = 0x9000, scoped, tag = 'internal scratch']
  #allocation2 [shape = 'f32[8,1]{1,0:T(8,128)}', space=vmem, size = 0x1000, scoped, tag = 'scratch operand']
  %s0 = inlined_call_operand.vmem [shape: f32[8,1], index: 0, kind: input, shape index: {}]
  %s1 = inlined_call_operand.vmem [shape: f32[8,1], index: 1, kind: input, shape index: {}]
  %s2 = inlined_call_operand.vmem [shape: f32[8,1], index: 2, kind: input, shape index: {}]
  %s3 = inlined_call_operand.vmem [shape: f32[8,1], index: 3, kind: input, shape index: {}]
  %s4 = inlined_call_operand.vmem [shape: f32[4,256], index: 4, kind: input, shape index: {}]
  %s5 = inlined_call_operand.hbm [shape: f32[1,256], index: 5, kind: output, shape index: {0}]
  %s6 = inlined_call_operand.hbm [shape: s32[1,256], index: 6, kind: output, shape index: {1}]
  %s7 = inlined_call_operand.vmem [shape: s32[8,1], index: 7, kind: output, shape index: {2}]
  %8 = xla_tuple %s5, %s6, %s7
  %s9 = sld [smem:[#allocation0]]
  $region50: #{_iou_reduce.1} parent=0
    _
  %s11 = ssub.s32 1, %s9
  %s12 = scalar_select 0, %s11, %s9
  $region1: #{_iou_reduce.1} parent=0
    #allocation3 [shape = 'u8[1024]{0}', space=vmem, size = 0x400, scoped, tag = 'output window, operand 0, single buffered']
    #allocation4 [shape = 's32[1]{0}', space=sflag, size = 0x4, scoped, tag = 'scoped memory for _iou_reduce.1']
    #allocation5 [shape = 'u8[1024]{0}', space=vmem, size = 0x400, scoped, tag = 'output window, operand 1, single buffered']
    #allocation6 [shape = 's32[1]{0}', space=sflag, size = 0x4, scoped, tag = 'scoped memory for _iou_reduce.1']
    %13 = vsyncpa [#allocation4], 0
    %14 = vsyncpa [#allocation6], 0
    // Predicated region
    $region2: #{_iou_reduce.1} parent=1 // pred_check
      _
    $region3: #{_iou_reduce.1} parent=1 // pred_check_branch
      %16 = sbr.rel (0) target = $region5
    $region4: #{_iou_reduce.1} parent=1 // pred_region
      _
    $region5: #{_iou_reduce.1} parent=1 // pred_fallthru
      _
    // Predicated region
    $region6: #{_iou_reduce.1} parent=1 // pred_check
      _
    $region7: #{_iou_reduce.1} parent=1 // pred_check_branch
      %18 = sbr.rel (0) target = $region9
    $region8: #{_iou_reduce.1} parent=1 // pred_region
      _
    $region9: #{_iou_reduce.1} parent=1 // pred_fallthru
      _
    // Predicated region
    $region10: #{_iou_reduce.1} parent=1 // pred_check
      _
    $region11: #{_iou_reduce.1} parent=1 // pred_check_branch
      %20 = sbr.rel (0) target = $region13
    $region12: #{_iou_reduce.1} parent=1 // pred_region
      _
    $region13: #{_iou_reduce.1} parent=1 // pred_fallthru
      _
    // Predicated region
    $region14: #{_iou_reduce.1} parent=1 // pred_check
      _
    $region15: #{_iou_reduce.1} parent=1 // pred_check_branch
      %22 = sbr.rel (0) target = $region17
    $region16: #{_iou_reduce.1} parent=1 // pred_region
      _
    $region17: #{_iou_reduce.1} parent=1 // pred_fallthru
      _
    // Predicated region
    $region18: #{_iou_reduce.1} parent=1 // pred_check
      _
    $region19: #{_iou_reduce.1} parent=1 // pred_check_branch
      %24 = sbr.rel (0) target = $region21
    $region20: #{_iou_reduce.1} parent=1 // pred_region
      _
    $region21: #{_iou_reduce.1} parent=1 // pred_fallthru
      _
    %p25 = scmp.eq.s32.totalorder 0, 0
    // Predicated region
    $region22: #{_iou_reduce.1} parent=1 // pred_check
      %p26 = pneg %p25
    $region23: #{_iou_reduce.1} parent=1 // pred_check_branch
      %28 = sbr.rel (%p26) target = $region25
    $region24: #{_iou_reduce.1} parent=1 // pred_region
      %vm29 = vcmask 7168
      %30 = vst.msk [vmem:[#allocation2] sm:$0xff] %vm29, -1.0
      %31 = vst.msk [vmem:[%s7] sm:$0xff] %vm29, 0
    $region25: #{_iou_reduce.1} parent=1 // pred_fallthru
      _
    %v32 = vld [vmem:[%s4] sm:$0xff]
    %v34 = vrot.slane %v32, 6
    %v36 = vsub.f32 %v32, %v34
    %v38 = vrot.slane %v36, 5
    %v39 = vrot.slane %v38, 4
    %v41 = vmul.f32 %v36, %v39
    %v42 = vadd.f32 %v41, 1e-08
    %v43 = vlaneseq
    %v44 = vshrl.u32 %v43, 7
    %v45 = vlaneseq
    %v46 = vand.u32 %v45, 127
    %v47 = vadd.s32 %v46, 128
    %v48 = vld [vmem:[%s0] sm:$0xff]
    %v49 = vld [vmem:[%s1] sm:$0xff]
    %v50 = vld [vmem:[%s2] sm:$0xff]
    %v51 = vld [vmem:[%s3] sm:$0xff]
    %v52 = vsub.f32 %v50, %v48
    %v53 = vsub.f32 %v51, %v49
    %v54 = vmul.f32 %v52, %v53
    %56 = vset.pattern.permute.xlu0 0
    %57 = vperm.xlu0 %56, %v50
    %v58 = vpop.permute.xlu0 %57
    %v60 = vperm.slane %v32, 2
    %v61 = vperm.slane %v32, 6
    %v64 = vperm.slane %v60, 2
    %v65 = vperm.slane %v61, 2
    %v66 = vmin.f32 %v58, %v64
    %v67 = vmin.f32 %v58, %v65
    %69 = vset.pattern.permute.xlu0 0
    %70 = vperm.xlu0 %69, %v48
    %v71 = vpop.permute.xlu0 %70
    %v73 = vperm.slane %v32, 0
    %v74 = vperm.slane %v32, 4
    %v77 = vperm.slane %v73, 0
    %v78 = vperm.slane %v74, 0
    %v79 = vmax.f32 %v71, %v77
    %v80 = vmax.f32 %v71, %v78
    %v81 = vsub.f32 %v66, %v79
    %v82 = vsub.f32 %v67, %v80
    %v83 = vmax.f32 %v81, 0.0
    %v84 = vmax.f32 %v82, 0.0
    %86 = vset.pattern.permute.xlu0 0
    %87 = vperm.xlu0 %86, %v51
    %v88 = vpop.permute.xlu0 %87
    %v90 = vperm.slane %v32, 3
    %v91 = vperm.slane %v32, 7
    %v94 = vperm.slane %v90, 3
    %v95 = vperm.slane %v91, 3
    %v96 = vmin.f32 %v88, %v94
    %v97 = vmin.f32 %v88, %v95
    %99 = vset.pattern.permute.xlu0 0
    %100 = vperm.xlu0 %99, %v49
    %v101 = vpop.permute.xlu0 %100
    %v103 = vperm.slane %v32, 1
    %v104 = vperm.slane %v32, 5
    %v107 = vperm.slane %v103, 1
    %v108 = vperm.slane %v104, 1
    %v109 = vmax.f32 %v101, %v107
    %v110 = vmax.f32 %v101, %v108
    %v111 = vsub.f32 %v96, %v109
    %v112 = vsub.f32 %v97, %v110
    %v113 = vmax.f32 %v111, 0.0
    %v114 = vmax.f32 %v112, 0.0
    %v115 = vmul.f32 %v83, %v113
    %v116 = vmul.f32 %v84, %v114
    %v118 = vperm.slane %v42, 2
    %v119 = vperm.slane %v42, 6
    %v122 = vperm.slane %v118, 2
    %v123 = vperm.slane %v119, 2
    %125 = vset.pattern.permute.xlu0 0
    %126 = vperm.xlu0 %125, %v54
    %v127 = vpop.permute.xlu0 %126
    %v129 = vadd.f32 %v122, %v127
    %v130 = vadd.f32 %v123, %v127
    %v131 = vsub.f32 %v129, %v115
    %v132 = vsub.f32 %v130, %v116
    %v133 = vrcp.pop %v131
    %v134 = vrcp.pop %v132
    %v135 = vmul.f32 %v115, %v133
    %v136 = vmul.f32 %v116, %v134
    %v137 = vrot.slane %v135, 4
    %v138 = vmax.f32 %v135, %v137
    %v139 = vrot.slane %v138, 2
    %v140 = vmax.f32 %v138, %v139
    %v141 = vrot.slane %v140, 1
    %v142 = vmax.f32 %v140, %v141
    %v143 = vrot.slane %v136, 4
    %v144 = vmax.f32 %v136, %v143
    %v145 = vrot.slane %v144, 2
    %v146 = vmax.f32 %v144, %v145
    %v147 = vrot.slane %v146, 1
    %v148 = vmax.f32 %v146, %v147
    %vm149 = vcmp.ge.f32.partialorder %v135, %v142
    %vm150 = vcmp.ge.f32.partialorder %v136, %v148
    %v151 = vsel %vm149, %v44, 8
    %v152 = vsel %vm150, %v44, 8
    %v153 = vrot.slane %v151, 4
    %vm154 = vcmp.lt.s32.totalorder %v151, %v153
    %v155 = vsel %vm154, %v151, %v153
    %v156 = vrot.slane %v155, 2
    %vm157 = vcmp.lt.s32.totalorder %v155, %v156
    %v158 = vsel %vm157, %v155, %v156
    %v159 = vrot.slane %v158, 1
    %vm160 = vcmp.lt.s32.totalorder %v158, %v159
    %v161 = vsel %vm160, %v158, %v159
    %v162 = vrot.slane %v152, 4
    %vm163 = vcmp.lt.s32.totalorder %v152, %v162
    %v164 = vsel %vm163, %v152, %v162
    %v165 = vrot.slane %v164, 2
    %vm166 = vcmp.lt.s32.totalorder %v164, %v165
    %v167 = vsel %vm166, %v164, %v165
    %v168 = vrot.slane %v167, 1
    %vm169 = vcmp.lt.s32.totalorder %v167, %v168
    %v170 = vsel %vm169, %v167, %v168
    %vm171 = vcmp.gt.f32.partialorder %v142, -1.0
    %vm172 = vcmp.gt.f32.partialorder %v148, -1.0
    %v173 = vsel %vm171, %v161, 0
    %v174 = vsel %vm172, %v170, 0
    %v175 = vsel %vm171, %v142, -1.0
    %v176 = vsel %vm172, %v148, -1.0
    %v177 = vmax.f32 %v135, %v136
    %178 = vmax.xlane.f32.xlu0 %v177
    %v179 = vpop.xlane.xlu0 %178
    %vm180 = vcmp.ge.f32.partialorder %v135, %v179
    %vm181 = vcmp.ge.f32.partialorder %v136, %v179
    %v182 = vsel %vm180, %v46, 256
    %v183 = vsel %vm181, %v47, 256
    %vm184 = vcmp.lt.s32.totalorder %v182, %v183
    %v185 = vsel %vm184, %v182, %v183
    %v186 = vand.u32 %v185, 65535
    %v187 = vshra.s32 %v185, 16
    %v188 = vcvt.s32.f32 %v186
    %v189 = vcvt.s32.f32 %v187
    %190 = vmin.xlane.f32.xlu0 %v189
    %v191 = vpop.xlane.xlu0 %190
    %vm192 = vcmp.eq.f32.partialorder %v189, %v191
    %v193 = vsel %vm192, %v188, inf
    %194 = vmin.xlane.f32.xlu0 %v193
    %v195 = vpop.xlane.xlu0 %194
    %v196 = vcvt.f32.s32 %v195
    %v197 = vcvt.f32.s32 %v191
    %v198 = vshll.u32 %v197, 16
    %v199 = vadd.s32 %v198, %v196
    %s200 = smul.u32 0, 256
    %v201 = vstv %s200
    %v202 = vadd.s32 %v199, %v201
    %v203 = vld [vmem:[#allocation2] sm:$0xff]
    %vm204 = vcmp.gt.f32.partialorder %v179, %v203
    %v205 = vld [vmem:[%s7] sm:$0xff]
    %v206 = vsel %vm204, %v202, %v205
    %vm207 = vcmask 7168
    %208 = vst.msk [vmem:[%s7] sm:$0xff] %vm207, %v206
    %v209 = vsel %vm204, %v179, %v203
    %210 = vst.msk [vmem:[#allocation2] sm:$0xff] %vm207, %v209
    %v213 = vrot.slane %v176, 7
    %vm214 = vcmask 1040384
    %v215 = vsel %vm214, %v175, %v213
    %v217 = vlaneseq
    %vm218 = vcmp.ge.s32.totalorder %v217, 0
    %vm219 = vcmp.lt.s32.totalorder %v217, 256
    %vm220 = vmand %vm218, %vm219
    %221 = vst.msk [vmem:[#allocation3] sm:$0x3] %vm220, %v215
    %v222 = vrot.slane %v174, 7
    %v223 = vsel %vm214, %v173, %v222
    %224 = vst.msk [vmem:[#allocation5] sm:$0x3] %vm220, %v223
    // Predicated region
    $region26: #{_iou_reduce.1} parent=1 // pred_check
      _
    $region27: #{_iou_reduce.1} parent=1 // pred_check_branch
      %226 = sbr.rel (0) target = $region29
    $region28: #{_iou_reduce.1} parent=1 // pred_region
      %228 = vsyncadd [#allocation4], 0
      %s230 = sshll.u32 [#allocation3], 4
      %s231 = int_to_ptr.vmem [resolvable:$true] %s230
      %s232 = sshll.u32 %s5, 4
      %s233 = int_to_ptr.hbm [resolvable:$true] %s232
      %235 = dma.vmem_to_hbm [thread:$0]  %s231, 32, %s233, [#allocation4]
    $region29: #{_iou_reduce.1} parent=1 // pred_fallthru
      _
    // Predicated region
    $region30: #{_iou_reduce.1} parent=1 // pred_check
      _
    $region31: #{_iou_reduce.1} parent=1 // pred_check_branch
      %237 = sbr.rel (0) target = $region33
    $region32: #{_iou_reduce.1} parent=1 // pred_region
      %239 = vsyncadd [#allocation6], 0
      %s241 = sshll.u32 [#allocation5], 4
      %s242 = int_to_ptr.vmem [resolvable:$true] %s241
      %s243 = sshll.u32 %s6, 4
      %s244 = int_to_ptr.hbm [resolvable:$true] %s243
      %246 = dma.vmem_to_hbm [thread:$0]  %s242, 32, %s244, [#allocation6]
    $region33: #{_iou_reduce.1} parent=1 // pred_fallthru
      _
    // Predicated region
    $region34: #{_iou_reduce.1} parent=1 // pred_check
      _
    $region35: #{_iou_reduce.1} parent=1 // pred_check_branch
      %248 = sbr.rel (0) target = $region37
    $region36: #{_iou_reduce.1} parent=1 // pred_region
      _
    $region37: #{_iou_reduce.1} parent=1 // pred_fallthru
      _
    // Predicated region
    $region38: #{_iou_reduce.1} parent=1 // pred_check
      _
    $region39: #{_iou_reduce.1} parent=1 // pred_check_branch
      %250 = sbr.rel (0) target = $region41
    $region40: #{_iou_reduce.1} parent=1 // pred_region
      %252 = dma.done [#allocation4], 32
    $region41: #{_iou_reduce.1} parent=1 // pred_fallthru
      _
    // Predicated region
    $region42: #{_iou_reduce.1} parent=1 // pred_check
      _
    $region43: #{_iou_reduce.1} parent=1 // pred_check_branch
      %254 = sbr.rel (0) target = $region45
    $region44: #{_iou_reduce.1} parent=1 // pred_region
      %256 = dma.done [#allocation6], 32
    $region45: #{_iou_reduce.1} parent=1 // pred_fallthru
      _
    // Predicated region
    $region46: #{_iou_reduce.1} parent=1 // pred_check
      _
    $region47: #{_iou_reduce.1} parent=1 // pred_check_branch
      %258 = sbr.rel (0) target = $region49
    $region48: #{_iou_reduce.1} parent=1 // pred_region
      _
    $region49: #{_iou_reduce.1} parent=1 // pred_fallthru
      _
    %259 = vsyncpa [#allocation4], 1
    %260 = vsyncpa [#allocation6], 1

</llo_original>
